<compile_context>
chip_gen: v7x
topology: tpu7x:2x2x1
jax: 0.10.0
libtpu: 0.0.40
codegen_flags: <defaults>
</compile_context>

<pallas_src>
import jax
import jax.numpy as jnp
from jax.experimental import pallas as pl
from jax.experimental.pallas import tpu as pltpu


def _round_up(n, m):
    return (n + m - 1) // m * m


def _vmem_capacity_bytes():
    # Trace-time hardware query; fall back to the smallest generation (v7x).
    try:
        return int(pltpu.get_tpu_info().vmem_capacity_bytes)
    except Exception:
        return 64 * 1024 * 1024


# ---------------------------------------------------------------------------
# Kernels
# ---------------------------------------------------------------------------

def _affine_kernel(x_ref, a_ref, b_ref, o_ref):
    # x_ref: (TM, D) streamed row tile; a_ref: (D, D) VMEM-resident;
    # b_ref: (1, D) VMEM-resident; o_ref: (TM, D).
    o_ref[...] = (
        jnp.dot(x_ref[...], a_ref[...], preferred_element_type=jnp.float32)
        + b_ref[...]
    ).astype(o_ref.dtype)


def _tiled_affine_kernel_f32(x_ref, a_ref, b_ref, o_ref):
    # Large-D path, f32 output: accumulate in place into o_ref (its block
    # index is constant across the k axis); bias folded into the k == 0 step.
    k = pl.program_id(2)
    part = jnp.dot(x_ref[...], a_ref[...], preferred_element_type=jnp.float32)

    @pl.when(k == 0)
    def _():
        o_ref[...] = b_ref[...] + part

    @pl.when(k != 0)
    def _():
        o_ref[...] += part


def _tiled_affine_kernel_acc(x_ref, a_ref, b_ref, o_ref, acc_ref):
    # Large-D path, low-precision output: f32 scratch accumulator, single cast.
    k = pl.program_id(2)

    @pl.when(k == 0)
    def _():
        acc_ref[...] = jnp.zeros_like(acc_ref)

    acc_ref[...] += jnp.dot(
        x_ref[...], a_ref[...], preferred_element_type=jnp.float32
    )

    @pl.when(k == pl.num_programs(2) - 1)
    def _():
        o_ref[...] = (acc_ref[...] + b_ref[...]).astype(o_ref.dtype)


# ---------------------------------------------------------------------------
# Wrapper
# ---------------------------------------------------------------------------

def _pick_tm(m_rows, row_bytes, *, target_tile_bytes=2 << 20, max_tm=1024):
    """Row-tile size: full extent for tiny M, else a multiple of 8 capped so
    the x / out tiles stay small, with >= 2 row blocks when M allows so the
    'parallel' axis can be sharded across v7x's two TensorCores."""
    if m_rows <= 8:
        return m_rows                              # full-extent block is legal
    tm = min(max_tm, max(8, (target_tile_bytes // max(row_bytes, 1)) // 8 * 8))
    half = _round_up(-(-m_rows // 2), 8)           # ceil(M/2), rounded to 8
    return max(8, min(tm, half))


def prepare_linear_dynamics_params(A, B):
    """One-time parameter packing (hoisted out of the per-call forward path)."""
    D = A.shape[0]
    params = {"A": A, "B2": B.reshape(1, D), "D": D, "pack": 1}
    if D < 128 and 128 % D == 0:
        p = 128 // D
        params["pack"] = p
        # y_packed = x_packed @ A_hat + B_hat, with x viewed as (M/p, p*D),
        # is exactly row-wise x @ A + B (block-diagonal structure).
        params["A_hat"] = jnp.kron(jnp.eye(p, dtype=A.dtype), A)
        params["B_hat2"] = jnp.tile(B, p).reshape(1, p * D)
    return params


def _affine_pallas(x2, A, b2):
    """y = x2 @ A + b2 for 2-D x2 (M, K), A (K, N), b2 (1, N)."""
    M, K = x2.shape
    N = A.shape[1]
    x_item = jnp.dtype(x2.dtype).itemsize
    a_bytes = A.size * jnp.dtype(A.dtype).itemsize

    # --- Resident-A path (the common case: small / medium D) ----------------
    if a_bytes <= 8 * 1024 * 1024:
        TM = _pick_tm(M, K * x_item)
        grid = (pl.cdiv(M, TM),)
        need = 2 * (a_bytes + TM * K * x_item + TM * N * x_item + N * 4) + (1 << 20)
        vmem_limit = int(min(48 << 20, max(32 << 20, 2 * need)))
        return pl.pallas_call(
            _affine_kernel,
            out_shape=jax.ShapeDtypeStruct((M, N), x2.dtype),
            grid=grid,
            in_specs=[
                pl.BlockSpec((TM, K), lambda i: (i, 0)),  # x row tile (streams)
                pl.BlockSpec((K, N), lambda i: (0, 0)),   # A: DMA'd once, resident
                pl.BlockSpec((1, N), lambda i: (0, 0)),   # bias: resident
            ],
            out_specs=pl.BlockSpec((TM, N), lambda i: (i, 0)),
            compiler_params=pltpu.CompilerParams(
                dimension_semantics=("parallel",),
                vmem_limit_bytes=vmem_limit,
            ),
        )(x2, A, b2)

    # --- Large-D tiled path (A too big for VMEM residency) -------------------
    if K % 128 == 0 and N % 128 == 0:
        big_vmem = _vmem_capacity_bytes() >= 96 * 1024 * 1024  # v5e/v6e: 128 MiB
        tile = 1024 if big_vmem else 512
        TN = min(tile, N)
        TK = min(tile, K)
        TM = _pick_tm(M, K * x_item, target_tile_bytes=1 << 20, max_tm=512)
        grid = (pl.cdiv(M, TM), N // TN, K // TK)
        if x2.dtype == jnp.float32:
            kernel, scratch = _tiled_affine_kernel_f32, []
        else:
            kernel = _tiled_affine_kernel_acc
            scratch = [pltpu.VMEM((TM, TN), jnp.float32)]
        need = (2 * (TM * TK + TK * TN + TM * TN) * 4
                + (TM * TN * 4 if scratch else 0) + (1 << 20))
        cap = (80 << 20) if big_vmem else (48 << 20)
        vmem_limit = int(min(cap, max(32 << 20, 2 * need)))
        return pl.pallas_call(
            kernel,
            out_shape=jax.ShapeDtypeStruct((M, N), x2.dtype),
            grid=grid,
            in_specs=[
                pl.BlockSpec((TM, TK), lambda i, j, k: (i, k)),
                pl.BlockSpec((TK, TN), lambda i, j, k: (k, j)),
                pl.BlockSpec((1, TN), lambda i, j, k: (0, j)),
            ],
            out_specs=pl.BlockSpec((TM, TN), lambda i, j, k: (i, j)),
            scratch_shapes=scratch,
            compiler_params=pltpu.CompilerParams(
                dimension_semantics=("parallel", "parallel", "arbitrary"),
                vmem_limit_bytes=vmem_limit,
            ),
        )(x2, A, b2)

    # TODO(synk): very large D that is not a multiple of 128 — XLA fallback.
    return (x2 @ A + b2).astype(x2.dtype)


def linear_dynamics_forward(x, params):
    """Pallas TPU implementation of LinearDynamics.forward: x @ A + B.

    x: [..., D] (any number of leading dims); params from
    prepare_linear_dynamics_params(A, B).
    Note: for tiny problems XLA's fused matmul+bias may win; callers can
    simply use `x @ A + B` in that regime.
    """
    D = params["D"]
    lead = x.shape[:-1]
    x2 = x.reshape(-1, D)
    M = x2.shape[0]
    if M == 0:
        return jnp.zeros((*lead, D), x.dtype)

    p = params["pack"]
    if p > 1 and M % p == 0:
        # Lane-packed small-D path: view rows in groups of p so the feature
        # axis is a dense 128 lanes (free row-major reshape, no HBM padding).
        xk = x2.reshape(M // p, p * D)
        out = _affine_pallas(xk, params["A_hat"], params["B_hat2"])
    else:
        out = _affine_pallas(x2, params["A"], params["B2"])
    return out.reshape(*lead, D)


if __name__ == "__main__":
    key = jax.random.PRNGKey(0)
    k_x1, k_x2, k_a1, k_b1, k_a2, k_b2 = jax.random.split(key, 6)

    # Case 1: small state dim (D=32) -> lane-packed path (p = 128 // 32 = 4).
    batch, seq, D = 2, 8, 32
    A1 = jax.random.normal(k_a1, (D, D), dtype=jnp.float32) * 0.1
    B1 = jax.random.normal(k_b1, (D,), dtype=jnp.float32) * 0.1
    x1 = jax.random.normal(k_x1, (batch, seq, D), dtype=jnp.float32)
    params1 = prepare_linear_dynamics_params(A1, B1)
    y1 = linear_dynamics_forward(x1, params1)
    jax.block_until_ready(y1)
    ref1 = x1 @ A1 + B1
    assert y1.shape == (batch, seq, D)
    assert jnp.allclose(y1, ref1, atol=1e-5, rtol=1e-5)

    # Case 2: D=48 (no lane packing), M=15 (partial edge row block) ->
    # unpacked resident-A path; exercises full-extent D blocks + cdiv grid.
    batch2, seq2, D2 = 3, 5, 48
    A2 = jax.random.normal(k_a2, (D2, D2), dtype=jnp.float32) * 0.1
    B2 = jax.random.normal(k_b2, (D2,), dtype=jnp.float32) * 0.1
    x2 = jax.random.normal(k_x2, (batch2, seq2, D2), dtype=jnp.float32)
    params2 = prepare_linear_dynamics_params(A2, B2)
    y2 = linear_dynamics_forward(x2, params2)
    jax.block_until_ready(y2)
    ref2 = x2 @ A2 + B2
    assert y2.shape == (batch2, seq2, D2)
    assert jnp.allclose(y2, ref2, atol=1e-5, rtol=1e-5)

    # R (process noise) and sample_forward (stochastic rollout) are not part
    # of forward(); TODO(synk): sample_forward not implemented, forward only.

    print("KERNEL_OK")
</pallas_src>

<mosaic_0001>
module attributes {stable_mosaic.version = 11 : i64} {
  func.func @_affine_kernel(%arg0: i32, %arg1: memref<4x128xf32, #tpu.memory_space<vmem>>, %arg2: memref<128x128xf32, #tpu.memory_space<vmem>>, %arg3: memref<1x128xf32, #tpu.memory_space<vmem>>, %arg4: memref<4x128xf32, #tpu.memory_space<vmem>>) attributes {dimension_semantics = [#tpu.dimension_semantics<parallel>], iteration_bounds = array<i64: 1>, scalar_prefetch = 0 : i64, scratch_operands = 0 : i64, tpu.core_type = #tpu.core_type<tc>, window_params = [{transform_indices = @transform_0, window_bounds = array<i64: 4, 128>}, {pipeline_mode = #tpu.pipeline_mode<synchronous>, transform_indices = @transform_1, window_bounds = array<i64: 128, 128>}, {pipeline_mode = #tpu.pipeline_mode<synchronous>, transform_indices = @transform_2, window_bounds = array<i64: 1, 128>}, {transform_indices = @transform_3, window_bounds = array<i64: 4, 128>}]} {
    %c0 = arith.constant 0 : index
    %c0_0 = arith.constant 0 : index
    %0 = vector.load %arg1[%c0, %c0_0] : memref<4x128xf32, #tpu.memory_space<vmem>>, vector<4x128xf32>
    %c0_1 = arith.constant 0 : index
    %c0_2 = arith.constant 0 : index
    %1 = vector.load %arg2[%c0_1, %c0_2] : memref<128x128xf32, #tpu.memory_space<vmem>>, vector<128x128xf32>
    %cst = arith.constant dense<0.000000e+00> : vector<4x128xf32>
    %2 = tpu.matmul %0, %1, %cst {dimension_numbers = #tpu.dot_dimension_numbers<[1], [0], [0], [1], [0, 0, 1, 1], [], []>} : vector<4x128xf32>, vector<128x128xf32>, vector<4x128xf32> -> vector<4x128xf32>
    %c0_3 = arith.constant 0 : index
    %c0_4 = arith.constant 0 : index
    %3 = vector.load %arg3[%c0_3, %c0_4] : memref<1x128xf32, #tpu.memory_space<vmem>>, vector<1x128xf32>
    %4 = vector.broadcast %3 : vector<1x128xf32> to vector<4x128xf32>
    %5 = arith.addf %2, %4 : vector<4x128xf32>
    %c0_5 = arith.constant 0 : index
    %c0_6 = arith.constant 0 : index
    %6 = vector.load %arg4[%c0_5, %c0_6] : memref<4x128xf32, #tpu.memory_space<vmem>>, vector<4x128xf32>
    tpu.vector_store %arg4[%c0_5, %c0_6], %5 {strides = array<i32>} : memref<4x128xf32, #tpu.memory_space<vmem>>, vector<4x128xf32>,
    return
  }
  func.func @transform_0(%arg0: i32) -> (i32, i32) {
    %c0_i32 = arith.constant 0 : i32
    %c0_i32_0 = arith.constant 0 : i32
    return %arg0, %c0_i32 : i32, i32
  }
  func.func @transform_1(%arg0: i32) -> (i32, i32) {
    %c0_i32 = arith.constant 0 : i32
    %c0_i32_0 = arith.constant 0 : i32
    %c0_i32_1 = arith.constant 0 : i32
    return %c0_i32, %c0_i32_0 : i32, i32
  }
  func.func @transform_2(%arg0: i32) -> (i32, i32) {
    %c0_i32 = arith.constant 0 : i32
    %c0_i32_0 = arith.constant 0 : i32
    %c0_i32_1 = arith.constant 0 : i32
    return %c0_i32, %c0_i32_0 : i32, i32
  }
  func.func @transform_3(%arg0: i32) -> (i32, i32) {
    %c0_i32 = arith.constant 0 : i32
    %c0_i32_0 = arith.constant 0 : i32
    return %arg0, %c0_i32 : i32, i32
  }
}

</mosaic_0001>

<llo_original>
// kernel: tpu_custom_call.1
$region0: #{tpu_custom_call.1}
  #allocation0 [shape = 'u32[]', space=smem, size = 0x4, offset = 0x4, fixed_abs, tag = 'smem constant byte address 0x4 - core index']
  #allocation1 [shape = 'u32[144,128]{1,0:T(1,128)}', space=vmem, size = 0x12000, scoped, tag = 'internal scratch']
  %s0 = inlined_call_operand.hbm [shape: f32[4,128], index: 0, kind: input, shape index: {}]
  %s1 = inlined_call_operand.hbm [shape: f32[128,128], index: 1, kind: input, shape index: {}]
  %s2 = inlined_call_operand.vmem [shape: f32[1,128], index: 2, kind: input, shape index: {}]
  %s3 = inlined_call_operand.hbm [shape: f32[4,128], index: 3, kind: output, shape index: {}]
  %s4 = sld [smem:[#allocation0]]
  $region30: #{tpu_custom_call.1} parent=0
    _
  %s6 = ssub.s32 1, %s4
  %s7 = scalar_select 0, %s6, %s4
  $region1: #{tpu_custom_call.1} parent=0
    #allocation2 [shape = 'u8[2048]{0}', space=vmem, size = 0x800, scoped, tag = 'input window, operand 0, single buffered']
    #allocation3 [shape = 's32[1]{0}', space=sflag, size = 0x4, scoped, tag = 'scoped memory for tpu_custom_call.1']
    #allocation4 [shape = 's32[1]{0}', space=sflag, size = 0x4, scoped, tag = 'scoped memory for tpu_custom_call.1']
    #allocation5 [shape = 'u8[65536]{0}', space=vmem, size = 0x10000, scoped, tag = 'input window, operand 1, single buffered']
    #allocation6 [shape = 's32[1]{0}', space=sflag, size = 0x4, scoped, tag = 'scoped memory for tpu_custom_call.1']
    #allocation7 [shape = 'u8[2048]{0}', space=vmem, size = 0x800, scoped, tag = 'output window, operand 0, single buffered']
    %8 = vsyncpa [#allocation3], 0
    %9 = vsyncpa [#allocation6], 0
    %10 = vsyncpa [#allocation4], 0
    // Predicated region
    $region2: #{tpu_custom_call.1} parent=1 // pred_check
      _
    $region3: #{tpu_custom_call.1} parent=1 // pred_check_branch
      %12 = sbr.rel (0) target = $region5
    $region4: #{tpu_custom_call.1} parent=1 // pred_region
      %s14 = ssub.s32 64, 64
      %15 = vsyncadd [#allocation3], %s14
      %s17 = sshll.u32 [#allocation2], 4
      %s18 = int_to_ptr.vmem [resolvable:$true] %s17
      %20 = dma.hbm_to_vmem [thread:$0]  %s0, 64, %s18, [#allocation3]
    $region5: #{tpu_custom_call.1} parent=1 // pred_fallthru
      _
    // Predicated region
    $region6: #{tpu_custom_call.1} parent=1 // pred_check
      _
    $region7: #{tpu_custom_call.1} parent=1 // pred_check_branch
      %22 = sbr.rel (0) target = $region9
    $region8: #{tpu_custom_call.1} parent=1 // pred_region
      %s24 = ssub.s32 2048, 2048
      %25 = vsyncadd [#allocation6], %s24
      %s26 = sshll.u32 [#allocation5], 4
      %s27 = int_to_ptr.vmem [resolvable:$true] %s26
      %32 = dma.hbm_to_vmem [thread:$0]  %s1, 2048, %s27, [#allocation6], 128, 128, 8
    $region9: #{tpu_custom_call.1} parent=1 // pred_fallthru
      _
    // Predicated region
    $region10: #{tpu_custom_call.1} parent=1 // pred_check
      _
    $region11: #{tpu_custom_call.1} parent=1 // pred_check_branch
      %34 = sbr.rel (0) target = $region13
    $region12: #{tpu_custom_call.1} parent=1 // pred_region
      _
    $region13: #{tpu_custom_call.1} parent=1 // pred_fallthru
      _
    // Predicated region
    $region14: #{tpu_custom_call.1} parent=1 // pred_check
      _
    $region15: #{tpu_custom_call.1} parent=1 // pred_check_branch
      %36 = sbr.rel (0) target = $region17
    $region16: #{tpu_custom_call.1} parent=1 // pred_region
      %37 = dma.done [#allocation3], 64
    $region17: #{tpu_custom_call.1} parent=1 // pred_fallthru
      _
    // Predicated region
    $region18: #{tpu_custom_call.1} parent=1 // pred_check
      _
    $region19: #{tpu_custom_call.1} parent=1 // pred_check_branch
      %39 = sbr.rel (0) target = $region21
    $region20: #{tpu_custom_call.1} parent=1 // pred_region
      %40 = dma.done [#allocation6], 2048
    $region21: #{tpu_custom_call.1} parent=1 // pred_fallthru
      _
    %v41 = vld [vmem:[#allocation2] sm:$0xf]
    %v42 = vld [vmem:[#allocation5] sm:$0xff]
    %v43 = vld [vmem:[#allocation5 + $0x8] sm:$0xff]
    %v44 = vld [vmem:[#allocation5 + $0x10] sm:$0xff]
    %v45 = vld [vmem:[#allocation5 + $0x18] sm:$0xff]
    %v46 = vld [vmem:[#allocation5 + $0x20] sm:$0xff]
    %v47 = vld [vmem:[#allocation5 + $0x28] sm:$0xff]
    %v48 = vld [vmem:[#allocation5 + $0x30] sm:$0xff]
    %v49 = vld [vmem:[#allocation5 + $0x38] sm:$0xff]
    %v50 = vld [vmem:[#allocation5 + $0x40] sm:$0xff]
    %v51 = vld [vmem:[#allocation5 + $0x48] sm:$0xff]
    %v52 = vld [vmem:[#allocation5 + $0x50] sm:$0xff]
    %v53 = vld [vmem:[#allocation5 + $0x58] sm:$0xff]
    %v54 = vld [vmem:[#allocation5 + $0x60] sm:$0xff]
    %v55 = vld [vmem:[#allocation5 + $0x68] sm:$0xff]
    %v56 = vld [vmem:[#allocation5 + $0x70] sm:$0xff]
    %v57 = vld [vmem:[#allocation5 + $0x78] sm:$0xff]
    %v58 = vld [vmem:[%s2] sm:$0x1]
    %v60 = vlaneseq
    %v61 = vshrl.u32 %v60, 7
    %v62 = vsub.s32 0, %v61
    %v63 = vrot.slane %v58, %v62
    %65 = vmatprep.subr.mxu0 0.0
    %66 = vmatpush1.msra.mxu0 %v42
    %67 = vmatprep.subr.mxu0 0.0
    %68 = vmatpush1.msra.mxu0 %v43
    %69 = vmatprep.subr.mxu0 0.0
    %70 = vmatpush1.msra.mxu0 %v44
    %71 = vmatprep.subr.mxu0 0.0
    %72 = vmatpush1.msra.mxu0 %v45
    %73 = vmatprep.subr.mxu0 0.0
    %74 = vmatpush1.msra.mxu0 %v46
    %75 = vmatprep.subr.mxu0 0.0
    %76 = vmatpush1.msra.mxu0 %v47
    %77 = vmatprep.subr.mxu0 0.0
    %78 = vmatpush1.msra.mxu0 %v48
    %79 = vmatprep.subr.mxu0 0.0
    %80 = vmatpush1.msra.mxu0 %v49
    %81 = vmatprep.subr.mxu0 0.0
    %82 = vmatpush1.msra.mxu0 %v50
    %83 = vmatprep.subr.mxu0 0.0
    %84 = vmatpush1.msra.mxu0 %v51
    %85 = vmatprep.subr.mxu0 0.0
    %86 = vmatpush1.msra.mxu0 %v52
    %87 = vmatprep.subr.mxu0 0.0
    %88 = vmatpush1.msra.mxu0 %v53
    %89 = vmatprep.subr.mxu0 0.0
    %90 = vmatpush1.msra.mxu0 %v54
    %91 = vmatprep.subr.mxu0 0.0
    %92 = vmatpush1.msra.mxu0 %v55
    %93 = vmatprep.subr.mxu0 0.0
    %94 = vmatpush1.msra.mxu0 %v56
    %95 = vmatprep.subr.mxu0 0.0
    %96 = vmatpush1.msra.mxu0 %v57
    %97 = vmatprep.subr.mxu0 0.0
    %98 = vmatpush1.msra.mxu0 0.0
    %99 = vmatprep.subr.mxu0 0.0
    %100 = vmatpush1.msra.mxu0 0.0
    %101 = vmatprep.subr.mxu0 0.0
    %102 = vmatpush1.msra.mxu0 0.0
    %103 = vmatprep.subr.mxu0 0.0
    %104 = vmatpush1.msra.mxu0 0.0
    %105 = vmatprep.subr.mxu0 0.0
    %106 = vmatpush1.msra.mxu0 0.0
    %107 = vmatprep.subr.mxu0 0.0
    %108 = vmatpush1.msra.mxu0 0.0
    %109 = vmatprep.subr.mxu0 0.0
    %110 = vmatpush1.msra.mxu0 0.0
    %111 = vmatprep.subr.mxu0 0.0
    %112 = vmatpush1.msra.mxu0 0.0
    %113 = vmatprep.subr.mxu0 0.0
    %114 = vmatpush1.msra.mxu0 0.0
    %115 = vmatprep.subr.mxu0 0.0
    %116 = vmatpush1.msra.mxu0 0.0
    %117 = vmatprep.subr.mxu0 0.0
    %118 = vmatpush1.msra.mxu0 0.0
    %119 = vmatprep.subr.mxu0 0.0
    %120 = vmatpush1.msra.mxu0 0.0
    %121 = vmatprep.subr.mxu0 0.0
    %122 = vmatpush1.msra.mxu0 0.0
    %123 = vmatprep.subr.mxu0 0.0
    %124 = vmatpush1.msra.mxu0 0.0
    %125 = vmatprep.subr.mxu0 0.0
    %126 = vmatpush1.msra.mxu0 0.0
    %127 = vmatprep.subr.mxu0 0.0
    %128 = vmatpush1.msra.mxu0 0.0
    %129 = vmatprep.mubr.f32.mxu0 0.0
    %130 = vmatmul.mubr.f32.gmra.mrb[0].mxu0 %v41
    %v131 = vpop.f32.mrb[0].mxu0
    %v132 = vadd.f32 %v63, %v131
    %v133 = vpop.f32.mrb[0].mxu0
    %134 = vdwg.mxu0
    %135 = vst [vmem:[#allocation7] sm:$0xf] %v132
    // Predicated region
    $region22: #{tpu_custom_call.1} parent=1 // pred_check
      _
    $region23: #{tpu_custom_call.1} parent=1 // pred_check_branch
      %137 = sbr.rel (0) target = $region25
    $region24: #{tpu_custom_call.1} parent=1 // pred_region
      %s139 = ssub.s32 64, 64
      %140 = vsyncadd [#allocation4], %s139
      %s142 = sshll.u32 [#allocation7], 4
      %s143 = int_to_ptr.vmem [resolvable:$true] %s142
      %145 = dma.vmem_to_hbm [thread:$0]  %s143, 64, %s3, [#allocation4]
    $region25: #{tpu_custom_call.1} parent=1 // pred_fallthru
      _
    // Predicated region
    $region26: #{tpu_custom_call.1} parent=1 // pred_check
      _
    $region27: #{tpu_custom_call.1} parent=1 // pred_check_branch
      %147 = sbr.rel (0) target = $region29
    $region28: #{tpu_custom_call.1} parent=1 // pred_region
      %148 = dma.done [#allocation4], 64
    $region29: #{tpu_custom_call.1} parent=1 // pred_fallthru
      _
    %149 = vsyncpa [#allocation3], 1
    %150 = vsyncpa [#allocation6], 1
    %151 = vsyncpa [#allocation4], 1

</llo_original>
